<compile_context>
chip_gen: v7x
topology: tpu7x:2x2x1
jax: 0.10.0
libtpu: 0.0.40
codegen_flags: <defaults>
</compile_context>

<pallas_src>
import jax
import jax.numpy as jnp
from jax.experimental import pallas as pl
from jax.experimental.pallas import tpu as pltpu


# ---------------------------------------------------------------------------
# Generation-aware VMEM budgeting
# ---------------------------------------------------------------------------
def _round_down(v, m):
    return (v // m) * m


def _round_up(v, m):
    return ((v + m - 1) // m) * m


def _tpu_vmem_limits():
    """(vmem_limit_bytes, tile_budget_bytes) derived from this chip's VMEM.

    v5e/v6e have 128 MiB VMEM per TensorCore, v7x has 64 MiB.  The Mosaic
    scoped-VMEM limit is set to ~78% of physical (~100 MiB on v5e/v6e, ~50 MiB
    on v7x) and our own tile-footprint budget to ~80% of that, leaving headroom
    for Mosaic-internal scratch.
    """
    try:
        cap = int(pltpu.get_tpu_info().vmem_capacity_bytes)
    except Exception:
        cap = 64 << 20                      # conservative fallback: v7x per-TC size
    vmem_limit = int(cap * 0.78)
    tile_budget = int(vmem_limit * 0.80)
    return vmem_limit, tile_budget


# ---------------------------------------------------------------------------
# Training-mode kernel
# ---------------------------------------------------------------------------
def _nes_train_kernel(x_ref, w_ref, b_ref, weps_ref, beps_ref, o_ref, acc_ref):
    # x_ref:    (Pt, tk)           input chunk along D_in
    # w_ref:    (tk, D_out)        shared-W chunk (streamed over D_in)
    # b_ref:    (1, D_out)         shared bias
    # weps_ref: (Pt, tk, D_out)    eps chunk (dominant HBM stream; may be bf16)
    # beps_ref: (Pt, D_out)
    # acc_ref:  (Pt, D_out) f32    accumulator across D_in chunks
    k = pl.program_id(1)

    @pl.when(k == 0)
    def _():
        acc_ref[...] = jnp.zeros_like(acc_ref)

    xk = x_ref[...]                                         # native dtype for the MXU

    # Shared-base contribution for this D_in chunk: one MXU matmul per tile.
    base = jnp.dot(xk, w_ref[...], preferred_element_type=jnp.float32)

    # Per-member eps contribution: VPU multiply + sublane reduce over the chunk.
    #   delta[p, o] += sum_d x[p, d] * weight_eps[p, d, o]
    # (x cast + lane broadcast hoisted: computed once per chunk, no inner loop.)
    xf = xk.astype(jnp.float32)
    delta = jnp.sum(xf[:, :, None] * weps_ref[...].astype(jnp.float32), axis=1)

    acc_ref[...] += base + delta

    @pl.when(k == pl.num_programs(1) - 1)
    def _():
        out = (acc_ref[...]
               + b_ref[...].astype(jnp.float32)
               + beps_ref[...].astype(jnp.float32))
        o_ref[...] = out.astype(o_ref.dtype)


def _choose_train_tiles(P, D_in, D_out, x_bytes, w_bytes, eps_bytes, budget):
    """Pick (Pt, tk) so the per-step VMEM footprint fits `budget`.

    Footprint accounted per step:
      2 * Pt*tk*D_out*eps_bytes   double-buffered eps stream (dominant)
      1 * Pt*tk*D_out*4           f32 multiply-reduce temporary
      2 * Pt*tk*x_bytes           double-buffered x chunk
      2 * tk*D_out*w_bytes        double-buffered W chunk
      ~Pt*D_out*16 + small        accumulator, output, bias_eps, bias
    """
    # Reduction-tile candidates along D_in.  tk is the lane dim of the x block,
    # so it must be a multiple of 128 that divides D_in exactly, or the full D_in.
    if D_in <= 512 or D_in % 128 != 0:
        tk_cands = [D_in]
    else:
        tk_cands = [t for t in range(512, 127, -128) if D_in % t == 0] or [D_in]

    min_pt = P if P < 8 else 8
    chosen = None
    for tk in tk_cands:                                      # largest chunk first
        per_pt = (tk * D_out * (2 * eps_bytes + 4)           # eps double-buffer + f32 temp
                  + 2 * tk * x_bytes                         # x double-buffer
                  + 16 * D_out)                              # acc/out/bias_eps (conservative)
        fixed = 2 * tk * D_out * w_bytes + 2 * D_out * w_bytes
        avail = budget - fixed
        pt_max = avail // per_pt if avail > 0 else 0
        if pt_max >= P:
            chosen = (P, tk)
            break
        if pt_max >= min_pt:
            pt = P if P < 8 else int(_round_down(pt_max, 8))
            chosen = (pt, tk)
            break
    if chosen is None:
        # TODO(synk): also tile D_out for extremely wide layers; best effort here.
        chosen = (min_pt, tk_cands[-1])

    pt, tk = chosen
    pt = min(pt, P)

    # (a) v7x has 2 TensorCores sharded over the "parallel" P axis: make sure
    #     there are >= 2 P blocks whenever the population is big enough.
    if pt >= P and P >= 16:
        pt = _round_up(pl.cdiv(P, 2), 8)
    # (b) Guarantee >= 2 total grid steps so the dominant weight_eps DMA
    #     double-buffers against compute instead of fully serializing.
    if pl.cdiv(P, pt) * (D_in // tk) == 1 and D_in % 256 == 0:
        tk = D_in // 2
    return pt, tk


def nes_linear_train(x, weight, bias, weight_eps, bias_eps, *,
                     eps_dtype=None, vmem_limit_bytes=None,
                     tile_budget_bytes=None):
    P, D_in = x.shape
    D_out = weight.shape[1]
    assert weight_eps.shape == (P, D_in, D_out)
    assert bias_eps.shape == (P, D_out)
    bias2d = bias.reshape(1, D_out)

    # bf16 eps streaming: the kernel streams weight_eps in whatever dtype it is
    # given and upcasts in VMEM, so storing/passing eps as bf16 halves the
    # dominant HBM stream.  `eps_dtype` forces a cast here if the caller can't
    # store it in the narrow dtype upstream (that cast costs one extra pass).
    if eps_dtype is not None and weight_eps.dtype != jnp.dtype(eps_dtype):
        weight_eps = weight_eps.astype(eps_dtype)

    auto_limit, auto_budget = _tpu_vmem_limits()
    if vmem_limit_bytes is None:
        vmem_limit_bytes = auto_limit
    if tile_budget_bytes is None:
        tile_budget_bytes = min(auto_budget, int(vmem_limit_bytes * 0.80))

    pt, tk = _choose_train_tiles(
        P, D_in, D_out,
        jnp.dtype(x.dtype).itemsize,
        jnp.dtype(weight.dtype).itemsize,
        jnp.dtype(weight_eps.dtype).itemsize,
        tile_budget_bytes)

    grid = (pl.cdiv(P, pt), D_in // tk)     # (parallel P tiles, arbitrary D_in chunks)

    # TODO(synk): when D_out << 128, pack several members' D_out along the lane
    # axis upstream (lane-dense eps/out layout) to recover VPU/VMEM efficiency.
    grid_spec = pltpu.PrefetchScalarGridSpec(
        num_scalar_prefetch=0,
        grid=grid,
        in_specs=[
            pl.BlockSpec((pt, tk), lambda i, k: (i, k)),             # x chunk
            pl.BlockSpec((tk, D_out), lambda i, k: (k, 0)),          # W chunk (streamed)
            pl.BlockSpec((1, D_out), lambda i, k: (0, 0)),           # bias (constant)
            pl.BlockSpec((pt, tk, D_out), lambda i, k: (i, k, 0)),   # weight_eps chunk
            pl.BlockSpec((pt, D_out), lambda i, k: (i, 0)),          # bias_eps tile
        ],
        out_specs=pl.BlockSpec((pt, D_out), lambda i, k: (i, 0)),
        scratch_shapes=[pltpu.VMEM((pt, D_out), jnp.float32)],       # f32 accumulator
    )
    return pl.pallas_call(
        _nes_train_kernel,
        out_shape=jax.ShapeDtypeStruct((P, D_out), x.dtype),
        grid_spec=grid_spec,
        compiler_params=pltpu.CompilerParams(
            dimension_semantics=("parallel", "arbitrary"),
            vmem_limit_bytes=vmem_limit_bytes),
    )(x, weight, bias2d, weight_eps, bias_eps)


# ---------------------------------------------------------------------------
# Eval-mode kernel: tiled x @ W + b with an f32 VMEM accumulator.
# ---------------------------------------------------------------------------
def _nes_eval_kernel(x_ref, w_ref, b_ref, o_ref, acc_ref):
    @pl.when(pl.program_id(2) == 0)
    def _():
        acc_ref[...] = jnp.zeros_like(acc_ref)

    acc_ref[...] += jnp.dot(x_ref[...], w_ref[...],
                            preferred_element_type=jnp.float32)

    @pl.when(pl.program_id(2) == pl.num_programs(2) - 1)
    def _():
        o_ref[...] = (acc_ref[...] + b_ref[...].astype(jnp.float32)
                      ).astype(o_ref.dtype)


def _pick_reduction_tile(K, pref=512, align=128):
    """Largest tile <= pref that is a multiple of `align` and divides K exactly
    (the reduction axis must not rely on out-of-bounds padding)."""
    if K <= pref or K % align != 0:
        return K
    t = _round_down(pref, align)
    while t >= align:
        if K % t == 0:
            return t
        t -= align
    return K


def nes_linear_eval(x, weight, bias, *, tm=512, tn=512, tk_pref=512,
                    vmem_limit_bytes=None):
    M, K = x.shape
    N = weight.shape[1]
    bias2d = bias.reshape(1, N)
    if vmem_limit_bytes is None:
        vmem_limit_bytes, _ = _tpu_vmem_limits()

    tm = tm if M >= tm else M               # multiple of 8 (512) or == M
    tn = tn if N >= tn else N               # multiple of 128 (512) or == N
    tk = _pick_reduction_tile(K, pref=tk_pref)

    grid = (pl.cdiv(M, tm), pl.cdiv(N, tn), K // tk)
    grid_spec = pltpu.PrefetchScalarGridSpec(
        num_scalar_prefetch=0,
        grid=grid,
        in_specs=[
            pl.BlockSpec((tm, tk), lambda i, j, k: (i, k)),
            pl.BlockSpec((tk, tn), lambda i, j, k: (k, j)),
            pl.BlockSpec((1, tn), lambda i, j, k: (0, j)),
        ],
        out_specs=pl.BlockSpec((tm, tn), lambda i, j, k: (i, j)),
        scratch_shapes=[pltpu.VMEM((tm, tn), jnp.float32)],
    )
    return pl.pallas_call(
        _nes_eval_kernel,
        out_shape=jax.ShapeDtypeStruct((M, N), x.dtype),
        grid_spec=grid_spec,
        compiler_params=pltpu.CompilerParams(
            dimension_semantics=("parallel", "parallel", "arbitrary"),
            vmem_limit_bytes=vmem_limit_bytes),
    )(x, weight, bias2d)


def nes_linear_forward(x, weight, bias, weight_eps, bias_eps, training=True):
    if training:
        assert x.shape[0] == weight_eps.shape[0]
        assert x.shape[1] == weight.shape[0]
        return nes_linear_train(x, weight, bias, weight_eps, bias_eps)
    else:
        return nes_linear_eval(x, weight, bias)


if __name__ == "__main__":
    # Module hyperparameters (small shapes consistent with the module).
    population_size = 8
    input_dim = 32
    output_dim = 16

    key = jax.random.PRNGKey(0)
    k_w, k_b, k_weps, k_beps, k_x = jax.random.split(key, 5)

    # Deterministic "buffers" (synthetic init, mirroring torch.randn shapes).
    weight = jax.random.normal(k_w, (input_dim, output_dim), dtype=jnp.float32)
    bias = jax.random.normal(k_b, (output_dim,), dtype=jnp.float32)
    weight_eps = jax.random.normal(
        k_weps, (population_size, input_dim, output_dim), dtype=jnp.float32)
    bias_eps = jax.random.normal(
        k_beps, (population_size, output_dim), dtype=jnp.float32)

    # Input: (population_size, input_dim)
    x = jax.random.normal(k_x, (population_size, input_dim), dtype=jnp.float32)

    # --- Training-mode forward, f32 eps (exact module semantics) ---
    out_train = nes_linear_forward(x, weight, bias, weight_eps, bias_eps,
                                   training=True)
    out_train = jax.block_until_ready(out_train)
    ref_train = (jnp.einsum("pd,pde->pe", x, weight[None] + weight_eps)
                 + bias[None, :] + bias_eps)
    assert out_train.shape == (population_size, output_dim)
    assert jnp.allclose(out_train, ref_train, atol=1e-4, rtol=1e-4)

    # --- Training-mode forward, bf16-streamed eps (halves the dominant HBM
    #     stream; compare against a reference using the same bf16 eps) ---
    weight_eps_bf16 = weight_eps.astype(jnp.bfloat16)   # eps "stored" in bf16 upstream
    out_bf16 = nes_linear_forward(x, weight, bias, weight_eps_bf16, bias_eps,
                                  training=True)
    out_bf16 = jax.block_until_ready(out_bf16)
    ref_bf16 = (jnp.einsum("pd,pde->pe", x,
                           weight[None] + weight_eps_bf16.astype(jnp.float32))
                + bias[None, :] + bias_eps)
    assert jnp.allclose(out_bf16, ref_bf16, atol=1e-3, rtol=1e-3)

    # --- Eval-mode forward ---
    out_eval = nes_linear_forward(x, weight, bias, weight_eps, bias_eps,
                                  training=False)
    out_eval = jax.block_until_ready(out_eval)
    ref_eval = x @ weight + bias
    assert jnp.allclose(out_eval, ref_eval, atol=1e-4, rtol=1e-4)

    print("KERNEL_OK")
</pallas_src>

<mosaic_0001>
module attributes {stable_mosaic.version = 11 : i64} {
  func.func @_nes_train_kernel(%arg0: i32, %arg1: i32, %arg2: memref<8x32xf32, #tpu.memory_space<vmem>>, %arg3: memref<32x16xf32, #tpu.memory_space<vmem>>, %arg4: memref<1x16xf32, #tpu.memory_space<vmem>>, %arg5: memref<8x32x16xf32, #tpu.memory_space<vmem>>, %arg6: memref<8x16xf32, #tpu.memory_space<vmem>>, %arg7: memref<8x16xf32, #tpu.memory_space<vmem>>, %arg8: memref<8x16xf32, #tpu.memory_space<vmem>>) attributes {dimension_semantics = [#tpu.dimension_semantics<parallel>, #tpu.dimension_semantics<arbitrary>], iteration_bounds = array<i64: 1, 1>, scalar_prefetch = 0 : i64, scratch_operands = 1 : i64, tpu.core_type = #tpu.core_type<tc>, window_params = [{transform_indices = @transform_0, window_bounds = array<i64: 8, 32>}, {transform_indices = @transform_1, window_bounds = array<i64: 32, 16>}, {pipeline_mode = #tpu.pipeline_mode<synchronous>, transform_indices = @transform_2, window_bounds = array<i64: 1, 16>}, {transform_indices = @transform_3, window_bounds = array<i64: 8, 32, 16>}, {transform_indices = @transform_4, window_bounds = array<i64: 8, 16>}, {transform_indices = @transform_5, window_bounds = array<i64: 8, 16>}]} {
    %c0_i32 = arith.constant 0 : i32
    %0 = arith.cmpi eq, %arg1, %c0_i32 : i32
    %1 = arith.extui %0 : i1 to i32
    %c0_i32_0 = arith.constant 0 : i32
    %2 = arith.cmpi ne, %1, %c0_i32_0 : i32
    scf.if %2 {
      %cst_14 = arith.constant 0.000000e+00 : f32
      %18 = vector.broadcast %cst_14 : f32 to vector<8x16xf32>
      %c0_15 = arith.constant 0 : index
      %c0_16 = arith.constant 0 : index
      %19 = vector.load %arg8[%c0_15, %c0_16] : memref<8x16xf32, #tpu.memory_space<vmem>>, vector<8x16xf32>
      tpu.vector_store %arg8[%c0_15, %c0_16], %18 {strides = array<i32>} : memref<8x16xf32, #tpu.memory_space<vmem>>, vector<8x16xf32>,
    } else {
    }
    %c0 = arith.constant 0 : index
    %c0_1 = arith.constant 0 : index
    %3 = vector.load %arg2[%c0, %c0_1] : memref<8x32xf32, #tpu.memory_space<vmem>>, vector<8x32xf32>
    %c0_2 = arith.constant 0 : index
    %c0_3 = arith.constant 0 : index
    %4 = vector.load %arg3[%c0_2, %c0_3] : memref<32x16xf32, #tpu.memory_space<vmem>>, vector<32x16xf32>
    %cst = arith.constant dense<0.000000e+00> : vector<8x16xf32>
    %5 = tpu.matmul %3, %4, %cst {dimension_numbers = #tpu.dot_dimension_numbers<[1], [0], [0], [1], [0, 0, 1, 1], [], []>} : vector<8x32xf32>, vector<32x16xf32>, vector<8x16xf32> -> vector<8x16xf32>
    %6 = vector.shape_cast %3 : vector<8x32xf32> to vector<8x32x1xf32>
    %c0_4 = arith.constant 0 : index
    %c0_5 = arith.constant 0 : index
    %c0_6 = arith.constant 0 : index
    %7 = vector.load %arg5[%c0_4, %c0_5, %c0_6] : memref<8x32x16xf32, #tpu.memory_space<vmem>>, vector<8x32x16xf32>
    %8 = vector.broadcast %6 : vector<8x32x1xf32> to vector<8x32x16xf32>
    %9 = arith.mulf %8, %7 : vector<8x32x16xf32>
    %cst_7 = arith.constant dense<0.000000e+00> : vector<8x16xf32>
    %10 = vector.multi_reduction <add>, %9, %cst_7 [1] : vector<8x32x16xf32> to vector<8x16xf32>
    %c0_8 = arith.constant 0 : index
    %c0_9 = arith.constant 0 : index
    %11 = vector.load %arg8[%c0_8, %c0_9] : memref<8x16xf32, #tpu.memory_space<vmem>>, vector<8x16xf32>
    %12 = arith.addf %5, %10 : vector<8x16xf32>
    %13 = arith.addf %11, %12 : vector<8x16xf32>
    %c0_10 = arith.constant 0 : index
    %c0_11 = arith.constant 0 : index
    %14 = vector.load %arg8[%c0_10, %c0_11] : memref<8x16xf32, #tpu.memory_space<vmem>>, vector<8x16xf32>
    tpu.vector_store %arg8[%c0_10, %c0_11], %13 {strides = array<i32>} : memref<8x16xf32, #tpu.memory_space<vmem>>, vector<8x16xf32>,
    %c0_i32_12 = arith.constant 0 : i32
    %15 = arith.cmpi eq, %arg1, %c0_i32_12 : i32
    %16 = arith.extui %15 : i1 to i32
    %c0_i32_13 = arith.constant 0 : i32
    %17 = arith.cmpi ne, %16, %c0_i32_13 : i32
    scf.if %17 {
      %c0_14 = arith.constant 0 : index
      %c0_15 = arith.constant 0 : index
      %18 = vector.load %arg8[%c0_14, %c0_15] : memref<8x16xf32, #tpu.memory_space<vmem>>, vector<8x16xf32>
      %c0_16 = arith.constant 0 : index
      %c0_17 = arith.constant 0 : index
      %19 = vector.load %arg4[%c0_16, %c0_17] : memref<1x16xf32, #tpu.memory_space<vmem>>, vector<1x16xf32>
      %20 = vector.broadcast %19 : vector<1x16xf32> to vector<8x16xf32>
      %21 = arith.addf %18, %20 : vector<8x16xf32>
      %c0_18 = arith.constant 0 : index
      %c0_19 = arith.constant 0 : index
      %22 = vector.load %arg6[%c0_18, %c0_19] : memref<8x16xf32, #tpu.memory_space<vmem>>, vector<8x16xf32>
      %23 = arith.addf %21, %22 : vector<8x16xf32>
      %c0_20 = arith.constant 0 : index
      %c0_21 = arith.constant 0 : index
      %24 = vector.load %arg7[%c0_20, %c0_21] : memref<8x16xf32, #tpu.memory_space<vmem>>, vector<8x16xf32>
      tpu.vector_store %arg7[%c0_20, %c0_21], %23 {strides = array<i32>} : memref<8x16xf32, #tpu.memory_space<vmem>>, vector<8x16xf32>,
    } else {
    }
    return
  }
  func.func @transform_0(%arg0: i32, %arg1: i32) -> (i32, i32) {
    %c0_i32 = arith.constant 0 : i32
    return %arg0, %arg1 : i32, i32
  }
  func.func @transform_1(%arg0: i32, %arg1: i32) -> (i32, i32) {
    %c0_i32 = arith.constant 0 : i32
    %c0_i32_0 = arith.constant 0 : i32
    return %arg1, %c0_i32 : i32, i32
  }
  func.func @transform_2(%arg0: i32, %arg1: i32) -> (i32, i32) {
    %c0_i32 = arith.constant 0 : i32
    %c0_i32_0 = arith.constant 0 : i32
    %c0_i32_1 = arith.constant 0 : i32
    return %c0_i32, %c0_i32_0 : i32, i32
  }
  func.func @transform_3(%arg0: i32, %arg1: i32) -> (i32, i32, i32) {
    %c0_i32 = arith.constant 0 : i32
    %c0_i32_0 = arith.constant 0 : i32
    return %arg0, %arg1, %c0_i32 : i32, i32, i32
  }
  func.func @transform_4(%arg0: i32, %arg1: i32) -> (i32, i32) {
    %c0_i32 = arith.constant 0 : i32
    %c0_i32_0 = arith.constant 0 : i32
    return %arg0, %c0_i32 : i32, i32
  }
  func.func @transform_5(%arg0: i32, %arg1: i32) -> (i32, i32) {
    %c0_i32 = arith.constant 0 : i32
    %c0_i32_0 = arith.constant 0 : i32
    return %arg0, %c0_i32 : i32, i32
  }
}

</mosaic_0001>

<llo_original>
// kernel: tpu_custom_call.1
$region0: #{tpu_custom_call.1}
  #allocation0 [shape = 'u32[]', space=smem, size = 0x4, offset = 0x4, fixed_abs, tag = 'smem constant byte address 0x4 - core index']
  #allocation1 [shape = 'u32[144,128]{1,0:T(1,128)}', space=vmem, size = 0x12000, scoped, tag = 'internal scratch']
  #allocation2 [shape = 'f32[8,16]{1,0:T(8,128)}', space=vmem, size = 0x1000, scoped, tag = 'scratch operand']
  %s0 = inlined_call_operand.vmem [shape: f32[8,32], index: 0, kind: input, shape index: {}]
  %s1 = inlined_call_operand.vmem [shape: f32[32,16], index: 1, kind: input, shape index: {}]
  %s2 = inlined_call_operand.vmem [shape: f32[1,16], index: 2, kind: input, shape index: {}]
  %s3 = inlined_call_operand.vmem [shape: f32[8,32,16], index: 3, kind: input, shape index: {}]
  %s4 = inlined_call_operand.vmem [shape: f32[8,16], index: 4, kind: input, shape index: {}]
  %s5 = inlined_call_operand.hbm [shape: f32[8,16], index: 5, kind: output, shape index: {}]
  %s6 = sld [smem:[#allocation0]]
  $region38: #{tpu_custom_call.1} parent=0
    _
  %s8 = ssub.s32 1, %s6
  %s9 = scalar_select 0, %s8, %s6
  $region1: #{tpu_custom_call.1} parent=0
    #allocation3 [shape = 'u8[4096]{0}', space=vmem, size = 0x1000, scoped, tag = 'output window, operand 0, single buffered']
    #allocation4 [shape = 's32[1]{0}', space=sflag, size = 0x4, scoped, tag = 'scoped memory for tpu_custom_call.1']
    %10 = vsyncpa [#allocation4], 0
    // Predicated region
    $region2: #{tpu_custom_call.1} parent=1 // pred_check
      _
    $region3: #{tpu_custom_call.1} parent=1 // pred_check_branch
      %12 = sbr.rel (0) target = $region5
    $region4: #{tpu_custom_call.1} parent=1 // pred_region
      _
    $region5: #{tpu_custom_call.1} parent=1 // pred_fallthru
      _
    // Predicated region
    $region6: #{tpu_custom_call.1} parent=1 // pred_check
      _
    $region7: #{tpu_custom_call.1} parent=1 // pred_check_branch
      %14 = sbr.rel (0) target = $region9
    $region8: #{tpu_custom_call.1} parent=1 // pred_region
      _
    $region9: #{tpu_custom_call.1} parent=1 // pred_fallthru
      _
    // Predicated region
    $region10: #{tpu_custom_call.1} parent=1 // pred_check
      _
    $region11: #{tpu_custom_call.1} parent=1 // pred_check_branch
      %16 = sbr.rel (0) target = $region13
    $region12: #{tpu_custom_call.1} parent=1 // pred_region
      _
    $region13: #{tpu_custom_call.1} parent=1 // pred_fallthru
      _
    // Predicated region
    $region14: #{tpu_custom_call.1} parent=1 // pred_check
      _
    $region15: #{tpu_custom_call.1} parent=1 // pred_check_branch
      %18 = sbr.rel (0) target = $region17
    $region16: #{tpu_custom_call.1} parent=1 // pred_region
      _
    $region17: #{tpu_custom_call.1} parent=1 // pred_fallthru
      _
    // Predicated region
    $region18: #{tpu_custom_call.1} parent=1 // pred_check
      _
    $region19: #{tpu_custom_call.1} parent=1 // pred_check_branch
      %20 = sbr.rel (0) target = $region21
    $region20: #{tpu_custom_call.1} parent=1 // pred_region
      _
    $region21: #{tpu_custom_call.1} parent=1 // pred_fallthru
      _
    %p21 = scmp.eq.s32.totalorder 0, 0
    // Predicated region
    $region22: #{tpu_custom_call.1} parent=1 // pred_check
      %p22 = pneg %p21
    $region23: #{tpu_custom_call.1} parent=1 // pred_check_branch
      %24 = sbr.rel (%p22) target = $region25
    $region24: #{tpu_custom_call.1} parent=1 // pred_region
      %vm25 = vcmask 130048
      %26 = vst.msk [vmem:[#allocation2] sm:$0xff] %vm25, 0.0
    $region25: #{tpu_custom_call.1} parent=1 // pred_fallthru
      _
    %v27 = vld [vmem:[%s0] sm:$0xff]
    %v28 = vld [vmem:[%s1] sm:$0xff]
    %v29 = vld [vmem:[%s1 + $0x8] sm:$0xff]
    %v30 = vld [vmem:[%s1 + $0x10] sm:$0xff]
    %v31 = vld [vmem:[%s1 + $0x18] sm:$0xff]
    %v32 = vlaneseq
    %v33 = vshrl.u32 %v32, 7
    %v34 = vsub.s32 0, %v33
    %v35 = vrot.slane %v27, %v34
    %37 = vbcast.lane.b32.xlu0 %v35, 256
    %v38 = vpop.permute.xlu0 %37
    %s40 = sor.u32 256, 8
    %41 = vbcast.lane.b32.xlu0 %v35, %s40
    %v42 = vpop.permute.xlu0 %41
    %s44 = sor.u32 256, 16
    %45 = vbcast.lane.b32.xlu0 %v35, %s44
    %v46 = vpop.permute.xlu0 %45
    %s48 = sor.u32 256, 24
    %49 = vbcast.lane.b32.xlu0 %v35, %s48
    %v50 = vpop.permute.xlu0 %49
    %v51 = vlaneseq
    %v52 = vshrl.u32 %v51, 7
    %v53 = vsub.s32 1, %v52
    %v54 = vrot.slane %v27, %v53
    %56 = vbcast.lane.b32.xlu0 %v54, 256
    %v57 = vpop.permute.xlu0 %56
    %s59 = sor.u32 256, 8
    %60 = vbcast.lane.b32.xlu0 %v54, %s59
    %v61 = vpop.permute.xlu0 %60
    %s63 = sor.u32 256, 16
    %64 = vbcast.lane.b32.xlu0 %v54, %s63
    %v65 = vpop.permute.xlu0 %64
    %s67 = sor.u32 256, 24
    %68 = vbcast.lane.b32.xlu0 %v54, %s67
    %v69 = vpop.permute.xlu0 %68
    %v70 = vlaneseq
    %v71 = vshrl.u32 %v70, 7
    %v72 = vsub.s32 2, %v71
    %v73 = vrot.slane %v27, %v72
    %75 = vbcast.lane.b32.xlu0 %v73, 256
    %v76 = vpop.permute.xlu0 %75
    %s78 = sor.u32 256, 8
    %79 = vbcast.lane.b32.xlu0 %v73, %s78
    %v80 = vpop.permute.xlu0 %79
    %s82 = sor.u32 256, 16
    %83 = vbcast.lane.b32.xlu0 %v73, %s82
    %v84 = vpop.permute.xlu0 %83
    %s86 = sor.u32 256, 24
    %87 = vbcast.lane.b32.xlu0 %v73, %s86
    %v88 = vpop.permute.xlu0 %87
    %v89 = vlaneseq
    %v90 = vshrl.u32 %v89, 7
    %v91 = vsub.s32 3, %v90
    %v92 = vrot.slane %v27, %v91
    %94 = vbcast.lane.b32.xlu0 %v92, 256
    %v95 = vpop.permute.xlu0 %94
    %s97 = sor.u32 256, 8
    %98 = vbcast.lane.b32.xlu0 %v92, %s97
    %v99 = vpop.permute.xlu0 %98
    %s101 = sor.u32 256, 16
    %102 = vbcast.lane.b32.xlu0 %v92, %s101
    %v103 = vpop.permute.xlu0 %102
    %s105 = sor.u32 256, 24
    %106 = vbcast.lane.b32.xlu0 %v92, %s105
    %v107 = vpop.permute.xlu0 %106
    %v108 = vlaneseq
    %v109 = vshrl.u32 %v108, 7
    %v110 = vsub.s32 4, %v109
    %v111 = vrot.slane %v27, %v110
    %113 = vbcast.lane.b32.xlu0 %v111, 256
    %v114 = vpop.permute.xlu0 %113
    %s116 = sor.u32 256, 8
    %117 = vbcast.lane.b32.xlu0 %v111, %s116
    %v118 = vpop.permute.xlu0 %117
    %s120 = sor.u32 256, 16
    %121 = vbcast.lane.b32.xlu0 %v111, %s120
    %v122 = vpop.permute.xlu0 %121
    %s124 = sor.u32 256, 24
    %125 = vbcast.lane.b32.xlu0 %v111, %s124
    %v126 = vpop.permute.xlu0 %125
    %v127 = vlaneseq
    %v128 = vshrl.u32 %v127, 7
    %v129 = vsub.s32 5, %v128
    %v130 = vrot.slane %v27, %v129
    %132 = vbcast.lane.b32.xlu0 %v130, 256
    %v133 = vpop.permute.xlu0 %132
    %s135 = sor.u32 256, 8
    %136 = vbcast.lane.b32.xlu0 %v130, %s135
    %v137 = vpop.permute.xlu0 %136
    %s139 = sor.u32 256, 16
    %140 = vbcast.lane.b32.xlu0 %v130, %s139
    %v141 = vpop.permute.xlu0 %140
    %s143 = sor.u32 256, 24
    %144 = vbcast.lane.b32.xlu0 %v130, %s143
    %v145 = vpop.permute.xlu0 %144
    %v146 = vlaneseq
    %v147 = vshrl.u32 %v146, 7
    %v148 = vsub.s32 6, %v147
    %v149 = vrot.slane %v27, %v148
    %151 = vbcast.lane.b32.xlu0 %v149, 256
    %v152 = vpop.permute.xlu0 %151
    %s154 = sor.u32 256, 8
    %155 = vbcast.lane.b32.xlu0 %v149, %s154
    %v156 = vpop.permute.xlu0 %155
    %s158 = sor.u32 256, 16
    %159 = vbcast.lane.b32.xlu0 %v149, %s158
    %v160 = vpop.permute.xlu0 %159
    %s162 = sor.u32 256, 24
    %163 = vbcast.lane.b32.xlu0 %v149, %s162
    %v164 = vpop.permute.xlu0 %163
    %v165 = vlaneseq
    %v166 = vshrl.u32 %v165, 7
    %v167 = vsub.s32 7, %v166
    %v168 = vrot.slane %v27, %v167
    %170 = vbcast.lane.b32.xlu0 %v168, 256
    %v171 = vpop.permute.xlu0 %170
    %s173 = sor.u32 256, 8
    %174 = vbcast.lane.b32.xlu0 %v168, %s173
    %v175 = vpop.permute.xlu0 %174
    %s177 = sor.u32 256, 16
    %178 = vbcast.lane.b32.xlu0 %v168, %s177
    %v179 = vpop.permute.xlu0 %178
    %s181 = sor.u32 256, 24
    %182 = vbcast.lane.b32.xlu0 %v168, %s181
    %v183 = vpop.permute.xlu0 %182
    %v184 = vld [vmem:[%s3] sm:$0xff]
    %v185 = vld [vmem:[%s3 + $0x8] sm:$0xff]
    %v186 = vld [vmem:[%s3 + $0x10] sm:$0xff]
    %v187 = vld [vmem:[%s3 + $0x18] sm:$0xff]
    %v188 = vld [vmem:[%s3 + $0x20] sm:$0xff]
    %v189 = vld [vmem:[%s3 + $0x28] sm:$0xff]
    %v190 = vld [vmem:[%s3 + $0x30] sm:$0xff]
    %v191 = vld [vmem:[%s3 + $0x38] sm:$0xff]
    %v192 = vld [vmem:[%s3 + $0x40] sm:$0xff]
    %v193 = vld [vmem:[%s3 + $0x48] sm:$0xff]
    %v194 = vld [vmem:[%s3 + $0x50] sm:$0xff]
    %v195 = vld [vmem:[%s3 + $0x58] sm:$0xff]
    %v196 = vld [vmem:[%s3 + $0x60] sm:$0xff]
    %v197 = vld [vmem:[%s3 + $0x68] sm:$0xff]
    %v198 = vld [vmem:[%s3 + $0x70] sm:$0xff]
    %v199 = vld [vmem:[%s3 + $0x78] sm:$0xff]
    %v200 = vld [vmem:[%s3 + $0x80] sm:$0xff]
    %v201 = vld [vmem:[%s3 + $0x88] sm:$0xff]
    %v202 = vld [vmem:[%s3 + $0x90] sm:$0xff]
    %v203 = vld [vmem:[%s3 + $0x98] sm:$0xff]
    %v204 = vld [vmem:[%s3 + $0xa0] sm:$0xff]
    %v205 = vld [vmem:[%s3 + $0xa8] sm:$0xff]
    %v206 = vld [vmem:[%s3 + $0xb0] sm:$0xff]
    %v207 = vld [vmem:[%s3 + $0xb8] sm:$0xff]
    %v208 = vld [vmem:[%s3 + $0xc0] sm:$0xff]
    %v209 = vld [vmem:[%s3 + $0xc8] sm:$0xff]
    %v210 = vld [vmem:[%s3 + $0xd0] sm:$0xff]
    %v211 = vld [vmem:[%s3 + $0xd8] sm:$0xff]
    %v212 = vld [vmem:[%s3 + $0xe0] sm:$0xff]
    %v213 = vld [vmem:[%s3 + $0xe8] sm:$0xff]
    %v214 = vld [vmem:[%s3 + $0xf0] sm:$0xff]
    %v215 = vld [vmem:[%s3 + $0xf8] sm:$0xff]
    %v216 = vmul.f32 %v38, %v184
    %v217 = vmul.f32 %v42, %v185
    %v218 = vmul.f32 %v46, %v186
    %v219 = vmul.f32 %v50, %v187
    %v220 = vmul.f32 %v57, %v188
    %v221 = vmul.f32 %v61, %v189
    %v222 = vmul.f32 %v65, %v190
    %v223 = vmul.f32 %v69, %v191
    %v224 = vmul.f32 %v76, %v192
    %v225 = vmul.f32 %v80, %v193
    %v226 = vmul.f32 %v84, %v194
    %v227 = vmul.f32 %v88, %v195
    %v228 = vmul.f32 %v95, %v196
    %v229 = vmul.f32 %v99, %v197
    %v230 = vmul.f32 %v103, %v198
    %v231 = vmul.f32 %v107, %v199
    %v232 = vmul.f32 %v114, %v200
    %v233 = vmul.f32 %v118, %v201
    %v234 = vmul.f32 %v122, %v202
    %v235 = vmul.f32 %v126, %v203
    %v236 = vmul.f32 %v133, %v204
    %v237 = vmul.f32 %v137, %v205
    %v238 = vmul.f32 %v141, %v206
    %v239 = vmul.f32 %v145, %v207
    %v240 = vmul.f32 %v152, %v208
    %v241 = vmul.f32 %v156, %v209
    %v242 = vmul.f32 %v160, %v210
    %v243 = vmul.f32 %v164, %v211
    %v244 = vmul.f32 %v171, %v212
    %v245 = vmul.f32 %v175, %v213
    %v246 = vmul.f32 %v179, %v214
    %v247 = vmul.f32 %v183, %v215
    %vm248 = vcmask 130048
    %v249 = vsel %vm248, %v216, 0.0
    %v250 = vsel %vm248, %v217, 0.0
    %v251 = vadd.f32 %v249, %v250
    %v252 = vsel %vm248, %v218, 0.0
    %v253 = vadd.f32 %v251, %v252
    %v254 = vsel %vm248, %v219, 0.0
    %v255 = vadd.f32 %v253, %v254
    %v256 = vrot.slane %v255, 4
    %v257 = vadd.f32 %v255, %v256
    %v258 = vrot.slane %v257, 2
    %v259 = vadd.f32 %v257, %v258
    %v260 = vrot.slane %v259, 1
    %v261 = vadd.f32 %v259, %v260
    %v262 = vsel %vm248, %v220, 0.0
    %v263 = vsel %vm248, %v221, 0.0
    %v264 = vadd.f32 %v262, %v263
    %v265 = vsel %vm248, %v222, 0.0
    %v266 = vadd.f32 %v264, %v265
    %v267 = vsel %vm248, %v223, 0.0
    %v268 = vadd.f32 %v266, %v267
    %v269 = vrot.slane %v268, 4
    %v270 = vadd.f32 %v268, %v269
    %v271 = vrot.slane %v270, 2
    %v272 = vadd.f32 %v270, %v271
    %v273 = vrot.slane %v272, 1
    %v274 = vadd.f32 %v272, %v273
    %v275 = vsel %vm248, %v224, 0.0
    %v276 = vsel %vm248, %v225, 0.0
    %v277 = vadd.f32 %v275, %v276
    %v278 = vsel %vm248, %v226, 0.0
    %v279 = vadd.f32 %v277, %v278
    %v280 = vsel %vm248, %v227, 0.0
    %v281 = vadd.f32 %v279, %v280
    %v282 = vrot.slane %v281, 4
    %v283 = vadd.f32 %v281, %v282
    %v284 = vrot.slane %v283, 2
    %v285 = vadd.f32 %v283, %v284
    %v286 = vrot.slane %v285, 1
    %v287 = vadd.f32 %v285, %v286
    %v288 = vsel %vm248, %v228, 0.0
    %v289 = vsel %vm248, %v229, 0.0
    %v290 = vadd.f32 %v288, %v289
    %v291 = vsel %vm248, %v230, 0.0
    %v292 = vadd.f32 %v290, %v291
    %v293 = vsel %vm248, %v231, 0.0
    %v294 = vadd.f32 %v292, %v293
    %v295 = vrot.slane %v294, 4
    %v296 = vadd.f32 %v294, %v295
    %v297 = vrot.slane %v296, 2
    %v298 = vadd.f32 %v296, %v297
    %v299 = vrot.slane %v298, 1
    %v300 = vadd.f32 %v298, %v299
    %v301 = vsel %vm248, %v232, 0.0
    %v302 = vsel %vm248, %v233, 0.0
    %v303 = vadd.f32 %v301, %v302
    %v304 = vsel %vm248, %v234, 0.0
    %v305 = vadd.f32 %v303, %v304
    %v306 = vsel %vm248, %v235, 0.0
    %v307 = vadd.f32 %v305, %v306
    %v308 = vrot.slane %v307, 4
    %v309 = vadd.f32 %v307, %v308
    %v310 = vrot.slane %v309, 2
    %v311 = vadd.f32 %v309, %v310
    %v312 = vrot.slane %v311, 1
    %v313 = vadd.f32 %v311, %v312
    %v314 = vsel %vm248, %v236, 0.0
    %v315 = vsel %vm248, %v237, 0.0
    %v316 = vadd.f32 %v314, %v315
    %v317 = vsel %vm248, %v238, 0.0
    %v318 = vadd.f32 %v316, %v317
    %v319 = vsel %vm248, %v239, 0.0
    %v320 = vadd.f32 %v318, %v319
    %v321 = vrot.slane %v320, 4
    %v322 = vadd.f32 %v320, %v321
    %v323 = vrot.slane %v322, 2
    %v324 = vadd.f32 %v322, %v323
    %v325 = vrot.slane %v324, 1
    %v326 = vadd.f32 %v324, %v325
    %v327 = vsel %vm248, %v240, 0.0
    %v328 = vsel %vm248, %v241, 0.0
    %v329 = vadd.f32 %v327, %v328
    %v330 = vsel %vm248, %v242, 0.0
    %v331 = vadd.f32 %v329, %v330
    %v332 = vsel %vm248, %v243, 0.0
    %v333 = vadd.f32 %v331, %v332
    %v334 = vrot.slane %v333, 4
    %v335 = vadd.f32 %v333, %v334
    %v336 = vrot.slane %v335, 2
    %v337 = vadd.f32 %v335, %v336
    %v338 = vrot.slane %v337, 1
    %v339 = vadd.f32 %v337, %v338
    %v340 = vsel %vm248, %v244, 0.0
    %v341 = vsel %vm248, %v245, 0.0
    %v342 = vadd.f32 %v340, %v341
    %v343 = vsel %vm248, %v246, 0.0
    %v344 = vadd.f32 %v342, %v343
    %v345 = vsel %vm248, %v247, 0.0
    %v346 = vadd.f32 %v344, %v345
    %v347 = vrot.slane %v346, 4
    %v348 = vadd.f32 %v346, %v347
    %v349 = vrot.slane %v348, 2
    %v350 = vadd.f32 %v348, %v349
    %v351 = vrot.slane %v350, 1
    %v352 = vadd.f32 %v350, %v351
    %v353 = vld [vmem:[#allocation2] sm:$0xff]
    %vm362 = vcmask 1041409
    %v363 = vsel %vm362, %v274, %v261
    %vm364 = vcmask 1042434
    %v365 = vsel %vm364, %v287, %v363
    %vm366 = vcmask 1043459
    %v367 = vsel %vm366, %v300, %v365
    %vm368 = vcmask 1044484
    %v369 = vsel %vm368, %v313, %v367
    %vm370 = vcmask 1045509
    %v371 = vsel %vm370, %v326, %v369
    %vm372 = vcmask 1046534
    %v373 = vsel %vm372, %v339, %v371
    %vm374 = vcmask 1047559
    %v375 = vsel %vm374, %v352, %v373
    %vm377 = vcmask 261120
    %v379 = vsel %vm377, %v27, 0
    %381 = vmatprep.subr.mxu0 0.0
    %382 = vmatpush1.msra.mxu0 %v28
    %383 = vmatprep.subr.mxu0 0.0
    %384 = vmatpush1.msra.mxu0 %v29
    %385 = vmatprep.subr.mxu0 0.0
    %386 = vmatpush1.msra.mxu0 %v30
    %387 = vmatprep.subr.mxu0 0.0
    %388 = vmatpush1.msra.mxu0 %v31
    %389 = vmatprep.subr.mxu0 0.0
    %390 = vmatpush1.msra.mxu0 0.0
    %391 = vmatprep.subr.mxu0 0.0
    %392 = vmatpush1.msra.mxu0 0.0
    %393 = vmatprep.subr.mxu0 0.0
    %394 = vmatpush1.msra.mxu0 0.0
    %395 = vmatprep.subr.mxu0 0.0
    %396 = vmatpush1.msra.mxu0 0.0
    %397 = vmatprep.subr.mxu0 0.0
    %398 = vmatpush1.msra.mxu0 0.0
    %399 = vmatprep.subr.mxu0 0.0
    %400 = vmatpush1.msra.mxu0 0.0
    %401 = vmatprep.subr.mxu0 0.0
    %402 = vmatpush1.msra.mxu0 0.0
    %403 = vmatprep.subr.mxu0 0.0
    %404 = vmatpush1.msra.mxu0 0.0
    %405 = vmatprep.subr.mxu0 0.0
    %406 = vmatpush1.msra.mxu0 0.0
    %407 = vmatprep.subr.mxu0 0.0
    %408 = vmatpush1.msra.mxu0 0.0
    %409 = vmatprep.subr.mxu0 0.0
    %410 = vmatpush1.msra.mxu0 0.0
    %411 = vmatprep.subr.mxu0 0.0
    %412 = vmatpush1.msra.mxu0 0.0
    %413 = vmatprep.subr.mxu0 0.0
    %414 = vmatpush1.msra.mxu0 0.0
    %415 = vmatprep.subr.mxu0 0.0
    %416 = vmatpush1.msra.mxu0 0.0
    %417 = vmatprep.subr.mxu0 0.0
    %418 = vmatpush1.msra.mxu0 0.0
    %419 = vmatprep.subr.mxu0 0.0
    %420 = vmatpush1.msra.mxu0 0.0
    %421 = vmatprep.subr.mxu0 0.0
    %422 = vmatpush1.msra.mxu0 0.0
    %423 = vmatprep.subr.mxu0 0.0
    %424 = vmatpush1.msra.mxu0 0.0
    %425 = vmatprep.subr.mxu0 0.0
    %426 = vmatpush1.msra.mxu0 0.0
    %427 = vmatprep.subr.mxu0 0.0
    %428 = vmatpush1.msra.mxu0 0.0
    %429 = vmatprep.subr.mxu0 0.0
    %430 = vmatpush1.msra.mxu0 0.0
    %431 = vmatprep.subr.mxu0 0.0
    %432 = vmatpush1.msra.mxu0 0.0
    %433 = vmatprep.subr.mxu0 0.0
    %434 = vmatpush1.msra.mxu0 0.0
    %435 = vmatprep.subr.mxu0 0.0
    %436 = vmatpush1.msra.mxu0 0.0
    %437 = vmatprep.subr.mxu0 0.0
    %438 = vmatpush1.msra.mxu0 0.0
    %439 = vmatprep.subr.mxu0 0.0
    %440 = vmatpush1.msra.mxu0 0.0
    %441 = vmatprep.subr.mxu0 0.0
    %442 = vmatpush1.msra.mxu0 0.0
    %443 = vmatprep.subr.mxu0 0.0
    %444 = vmatpush1.msra.mxu0 0.0
    %445 = vmatprep.mubr.f32.mxu0 0.0
    %446 = vmatmul.mubr.f32.gmra.mrb[0].mxu0 %v379
    %v447 = vpop.f32.mrb[0].mxu0
    %v448 = vadd.f32 %v375, %v447
    %v449 = vpop.f32.mrb[0].mxu0
    %450 = vdwg.mxu0
    %v451 = vadd.f32 %v353, %v448
    %452 = vst.msk [vmem:[#allocation2] sm:$0xff] %vm248, %v451
    // Predicated region
    $region26: #{tpu_custom_call.1} parent=1 // pred_check
      %p453 = pneg %p21
    $region27: #{tpu_custom_call.1} parent=1 // pred_check_branch
      %455 = sbr.rel (%p453) target = $region29
    $region28: #{tpu_custom_call.1} parent=1 // pred_region
      %v456 = vld [vmem:[#allocation2] sm:$0xff]
      %v457 = vld [vmem:[%s2] sm:$0x1]
      %v459 = vlaneseq
      %v460 = vshrl.u32 %v459, 7
      %v461 = vsub.s32 0, %v460
      %v462 = vrot.slane %v457, %v461
      %v464 = vadd.f32 %v456, %v462
      %v465 = vld [vmem:[%s4] sm:$0xff]
      %v466 = vadd.f32 %v464, %v465
      %467 = vst.msk [vmem:[#allocation3] sm:$0xff] %vm248, %v466
    $region29: #{tpu_custom_call.1} parent=1 // pred_fallthru
      _
    // Predicated region
    $region30: #{tpu_custom_call.1} parent=1 // pred_check
      _
    $region31: #{tpu_custom_call.1} parent=1 // pred_check_branch
      %469 = sbr.rel (0) target = $region33
    $region32: #{tpu_custom_call.1} parent=1 // pred_region
      %s471 = ssub.s32 128, 128
      %472 = vsyncadd [#allocation4], %s471
      %s474 = sshll.u32 [#allocation3], 4
      %s475 = int_to_ptr.vmem [resolvable:$true] %s474
      %477 = dma.vmem_to_hbm [thread:$0]  %s475, 128, %s5, [#allocation4]
    $region33: #{tpu_custom_call.1} parent=1 // pred_fallthru
      _
    // Predicated region
    $region34: #{tpu_custom_call.1} parent=1 // pred_check
      _
    $region35: #{tpu_custom_call.1} parent=1 // pred_check_branch
      %479 = sbr.rel (0) target = $region37
    $region36: #{tpu_custom_call.1} parent=1 // pred_region
      %480 = dma.done [#allocation4], 128
    $region37: #{tpu_custom_call.1} parent=1 // pred_fallthru
      _
    %481 = vsyncpa [#allocation4], 1

</llo_original>
